<compile_context>
chip_gen: v6e
topology: v6e:2x2x1
jax: 0.10.0
libtpu: 0.0.40
codegen_flags: <defaults>
</compile_context>

<pallas_src>
import functools

import jax
import jax.numpy as jnp
from jax import lax
from jax.experimental import pallas as pl
from jax.experimental.pallas import tpu as pltpu


# ---------------------------------------------------------------------------
# Fused kernel: one batch per program.
# ---------------------------------------------------------------------------
def _fused_attention_block_kernel(num_heads,
                                  x_ref,       # (1, L, E)  f32
                                  w_in_ref,    # (E, 3E)    bf16, Q-cols pre-scaled
                                  b_in_ref,    # (1, 3E)    f32,  Q part pre-scaled
                                  w_out_ref,   # (H, hd, E) bf16
                                  b_out_ref,   # (1, E)     f32
                                  o_ref):      # (1, L, E)  f32
    x = x_ref[0]                                   # (L, E) f32
    L, E = x.shape
    hd = E // num_heads

    # Packed Q/K/V projection, bf16 MXU inputs, f32 accumulation.
    xb = x.astype(jnp.bfloat16)
    qkv = jnp.dot(xb, w_in_ref[...], preferred_element_type=jnp.float32)
    qkv = qkv + b_in_ref[...]                      # (L, 3E) f32; Q already scaled

    # Per-head attention; out-projection contributions accumulated lane-merged,
    # so no head-concatenate / transpose is ever materialised.
    acc = jnp.zeros((L, E), jnp.float32)
    for h in range(num_heads):
        q = qkv[:, h * hd:(h + 1) * hd].astype(jnp.bfloat16)              # (L, hd)
        k = qkv[:, E + h * hd:E + (h + 1) * hd].astype(jnp.bfloat16)      # (L, hd)
        v = qkv[:, 2 * E + h * hd:2 * E + (h + 1) * hd].astype(jnp.bfloat16)

        # Scores: contract minor dims of both operands (MXU-native, no k.T relayout).
        s = lax.dot_general(q, k, (((1,), (1,)), ((), ())),
                            preferred_element_type=jnp.float32)           # (L, L)
        m = jnp.max(s, axis=-1, keepdims=True)
        p = jnp.exp(s - m)
        l = jnp.sum(p, axis=-1, keepdims=True)
        ctx = jnp.dot(p.astype(jnp.bfloat16), v,
                      preferred_element_type=jnp.float32)                 # (L, hd)
        ctx = ctx * pl.reciprocal(l, approx=True)

        # Out-projection contribution of this head: (L, hd) @ (hd, E).
        acc = acc + jnp.dot(ctx.astype(jnp.bfloat16), w_out_ref[h],
                            preferred_element_type=jnp.float32)           # (L, E)

    # Output-projection bias + residual, written as one lane-merged (L, E) slab.
    o_ref[0] = (acc + b_out_ref[...] + x).astype(o_ref.dtype)


def _vmem_budget_bytes(L, E, num_heads):
    """Rough per-program VMEM footprint -> explicit compiler budget."""
    bf16, f32 = 2, 4
    weights = bf16 * (E * 3 * E + E * E) + f32 * (3 * E + E)
    io_blocks = 2 * 2 * f32 * L * E                 # x + out blocks, double-buffered
    interm = f32 * (L * 3 * E + L * L + 2 * L * E)  # qkv, scores, ctx/acc
    est = weights + io_blocks + interm
    return int(min(64 * 2 ** 20, max(32 * 2 ** 20, 2 * est)))


# ---------------------------------------------------------------------------
# Parameters + forward wrapper
# ---------------------------------------------------------------------------
def init_params(key, dim):
    k1, k2 = jax.random.split(key)
    bound = 1.0 / (dim ** 0.5)
    return {
        # PyTorch nn.MultiheadAttention packed in-projection: (3*dim, dim), bias (3*dim,)
        "in_proj_weight": jax.random.uniform(k1, (3 * dim, dim), jnp.float32, -bound, bound),
        "in_proj_bias": jnp.zeros((3 * dim,), jnp.float32),
        # out_proj: Linear(dim, dim)
        "out_proj_weight": jax.random.uniform(k2, (dim, dim), jnp.float32, -bound, bound),
        "out_proj_bias": jnp.zeros((dim,), jnp.float32),
    }


def attention_block(x, params, num_heads=4):
    """x: (L, N, E) -> (L, N, E); self-attention + residual (matches forward())."""
    L, B, E = x.shape
    assert E % num_heads == 0
    hd = E // num_heads
    scale = 1.0 / float(hd) ** 0.5

    # --- tiny trace-time parameter prep -------------------------------------
    # Fold 1/sqrt(hd) into the Q columns of the packed in-projection (weight+bias);
    # cast matmul weights to bf16; split the out-projection by head so the kernel
    # can accumulate lane-merged contributions without a head-merge transpose.
    col_scale = jnp.concatenate(
        [jnp.full((E,), scale, jnp.float32), jnp.ones((2 * E,), jnp.float32)])
    w_in = (params["in_proj_weight"].T * col_scale[None, :]).astype(jnp.bfloat16)   # (E, 3E)
    b_in = (params["in_proj_bias"] * col_scale).reshape(1, 3 * E).astype(jnp.float32)
    w_out = params["out_proj_weight"].T.reshape(num_heads, hd, E).astype(jnp.bfloat16)
    b_out = params["out_proj_bias"].reshape(1, E).astype(jnp.float32)

    # (L, N, E) -> (B, L, E): each grid step gets one batch as a (1, L, E) block
    # whose trailing dims are the full array dims (clean TPU tiling).
    xb = jnp.transpose(x, (1, 0, 2))

    # TODO(synk): for very long sequences / large dim where one batch's fused block
    # no longer fits VMEM, switch to row-tiled projections + a KV-tiled
    # flash-attention (online softmax accumulator) instead of this fused path.
    kern = functools.partial(_fused_attention_block_kernel, num_heads)
    out = pl.pallas_call(
        kern,
        out_shape=jax.ShapeDtypeStruct((B, L, E), x.dtype),
        grid=(B,),
        in_specs=[
            pl.BlockSpec((1, L, E), lambda b: (b, 0, 0)),
            pl.BlockSpec((E, 3 * E), lambda b: (0, 0)),
            pl.BlockSpec((1, 3 * E), lambda b: (0, 0)),
            pl.BlockSpec((num_heads, hd, E), lambda b: (0, 0, 0)),
            pl.BlockSpec((1, E), lambda b: (0, 0)),
        ],
        out_specs=pl.BlockSpec((1, L, E), lambda b: (b, 0, 0)),
        compiler_params=pltpu.CompilerParams(
            dimension_semantics=("parallel",),
            vmem_limit_bytes=_vmem_budget_bytes(L, E, num_heads),
        ),
    )(xb, w_in, b_in, w_out, b_out)

    # NOTE: self.bn (BatchNorm1d) exists in __init__ but is never called in forward().
    return jnp.transpose(out, (1, 0, 2))


if __name__ == "__main__":
    key = jax.random.PRNGKey(0)
    k_x, k_p = jax.random.split(key)

    L, B, E, H = 8, 2, 32, 4                                # seq=8, batch=2, dim=32, 4 heads
    x = jax.random.normal(k_x, (L, B, E), jnp.float32)
    params = init_params(k_p, E)

    fwd = jax.jit(functools.partial(attention_block, num_heads=H))
    out = fwd(x, params)
    out = jax.block_until_ready(out)

    assert out.shape == (L, B, E), out.shape
    assert bool(jnp.all(jnp.isfinite(out)))
    print("KERNEL_OK")
</pallas_src>

<mosaic_0001>
module attributes {stable_mosaic.version = 11 : i64} {
  func.func @_fused_attention_block_kernel(%arg0: i32, %arg1: memref<1x8x32xf32, #tpu.memory_space<vmem>>, %arg2: memref<32x96xbf16, #tpu.memory_space<vmem>>, %arg3: memref<1x96xf32, #tpu.memory_space<vmem>>, %arg4: memref<4x8x32xbf16, #tpu.memory_space<vmem>>, %arg5: memref<1x32xf32, #tpu.memory_space<vmem>>, %arg6: memref<1x8x32xf32, #tpu.memory_space<vmem>>) attributes {dimension_semantics = [#tpu.dimension_semantics<parallel>], iteration_bounds = array<i64: 2>, scalar_prefetch = 0 : i64, scratch_operands = 0 : i64, tpu.core_type = #tpu.core_type<tc>, window_params = [{transform_indices = @transform_0, window_bounds = array<i64: 1, 8, 32>}, {pipeline_mode = #tpu.pipeline_mode<synchronous>, transform_indices = @transform_1, window_bounds = array<i64: 32, 96>}, {pipeline_mode = #tpu.pipeline_mode<synchronous>, transform_indices = @transform_2, window_bounds = array<i64: 1, 96>}, {pipeline_mode = #tpu.pipeline_mode<synchronous>, transform_indices = @transform_3, window_bounds = array<i64: 4, 8, 32>}, {pipeline_mode = #tpu.pipeline_mode<synchronous>, transform_indices = @transform_4, window_bounds = array<i64: 1, 32>}, {transform_indices = @transform_5, window_bounds = array<i64: 1, 8, 32>}]} {
    %c0 = arith.constant 0 : index
    %c0_0 = arith.constant 0 : index
    %c0_1 = arith.constant 0 : index
    %0 = vector.load %arg1[%c0, %c0_0, %c0_1] : memref<1x8x32xf32, #tpu.memory_space<vmem>>, vector<1x8x32xf32>
    %1 = vector.shape_cast %0 : vector<1x8x32xf32> to vector<8x32xf32>
    %2 = arith.truncf %1 : vector<8x32xf32> to vector<8x32xbf16>
    %c0_2 = arith.constant 0 : index
    %c0_3 = arith.constant 0 : index
    %3 = vector.load %arg2[%c0_2, %c0_3] : memref<32x96xbf16, #tpu.memory_space<vmem>>, vector<32x96xbf16>
    %cst = arith.constant dense<0.000000e+00> : vector<8x96xf32>
    %4 = tpu.matmul %2, %3, %cst {dimension_numbers = #tpu.dot_dimension_numbers<[1], [0], [0], [1], [0, 0, 1, 1], [], []>} : vector<8x32xbf16>, vector<32x96xbf16>, vector<8x96xf32> -> vector<8x96xf32>
    %c0_4 = arith.constant 0 : index
    %c0_5 = arith.constant 0 : index
    %5 = vector.load %arg3[%c0_4, %c0_5] : memref<1x96xf32, #tpu.memory_space<vmem>>, vector<1x96xf32>
    %6 = vector.broadcast %5 : vector<1x96xf32> to vector<8x96xf32>
    %7 = arith.addf %4, %6 : vector<8x96xf32>
    %cst_6 = arith.constant 0.000000e+00 : f32
    %8 = vector.broadcast %cst_6 : f32 to vector<8x32xf32>
    %9 = vector.extract_strided_slice %7 {offsets = [0, 0], sizes = [8, 8], strides = [1, 1]} : vector<8x96xf32> to vector<8x8xf32>
    %10 = arith.truncf %9 : vector<8x8xf32> to vector<8x8xbf16>
    %11 = vector.extract_strided_slice %7 {offsets = [0, 32], sizes = [8, 8], strides = [1, 1]} : vector<8x96xf32> to vector<8x8xf32>
    %12 = arith.truncf %11 : vector<8x8xf32> to vector<8x8xbf16>
    %13 = vector.extract_strided_slice %7 {offsets = [0, 64], sizes = [8, 8], strides = [1, 1]} : vector<8x96xf32> to vector<8x8xf32>
    %14 = arith.truncf %13 : vector<8x8xf32> to vector<8x8xbf16>
    %cst_7 = arith.constant dense<0.000000e+00> : vector<8x8xf32>
    %15 = tpu.matmul %10, %12, %cst_7 {dimension_numbers = #tpu.dot_dimension_numbers<[1], [1], [0], [0], [0, 0, 1, 0], [], []>} : vector<8x8xbf16>, vector<8x8xbf16>, vector<8x8xf32> -> vector<8x8xf32>
    %cst_8 = arith.constant dense<0xFF800000> : vector<8xf32>
    %16 = vector.multi_reduction <maximumf>, %15, %cst_8 [1] : vector<8x8xf32> to vector<8xf32>
    %17 = vector.shape_cast %16 : vector<8xf32> to vector<8x1xf32>
    %18 = vector.broadcast %17 : vector<8x1xf32> to vector<8x8xf32>
    %19 = arith.subf %15, %18 : vector<8x8xf32>
    %20 = math.exp %19 : vector<8x8xf32>
    %cst_9 = arith.constant dense<0.000000e+00> : vector<8xf32>
    %21 = vector.multi_reduction <add>, %20, %cst_9 [1] : vector<8x8xf32> to vector<8xf32>
    %22 = vector.shape_cast %21 : vector<8xf32> to vector<8x1xf32>
    %23 = arith.truncf %20 : vector<8x8xf32> to vector<8x8xbf16>
    %cst_10 = arith.constant dense<0.000000e+00> : vector<8x8xf32>
    %24 = tpu.matmul %23, %14, %cst_10 {dimension_numbers = #tpu.dot_dimension_numbers<[1], [0], [0], [1], [0, 0, 1, 1], [], []>} : vector<8x8xbf16>, vector<8x8xbf16>, vector<8x8xf32> -> vector<8x8xf32>
    %25 = tpu.reciprocal %22 {approx = true} : vector<8x1xf32> -> vector<8x1xf32>
    %26 = vector.broadcast %25 : vector<8x1xf32> to vector<8x8xf32>
    %27 = arith.mulf %24, %26 : vector<8x8xf32>
    %28 = arith.truncf %27 : vector<8x8xf32> to vector<8x8xbf16>
    %c0_11 = arith.constant 0 : index
    %c0_12 = arith.constant 0 : index
    %c0_13 = arith.constant 0 : index
    %29 = vector.load %arg4[%c0_11, %c0_12, %c0_13] : memref<4x8x32xbf16, #tpu.memory_space<vmem>>, vector<1x8x32xbf16>
    %30 = vector.shape_cast %29 : vector<1x8x32xbf16> to vector<8x32xbf16>
    %cst_14 = arith.constant dense<0.000000e+00> : vector<8x32xf32>
    %31 = tpu.matmul %28, %30, %cst_14 {dimension_numbers = #tpu.dot_dimension_numbers<[1], [0], [0], [1], [0, 0, 1, 1], [], []>} : vector<8x8xbf16>, vector<8x32xbf16>, vector<8x32xf32> -> vector<8x32xf32>
    %32 = arith.addf %8, %31 : vector<8x32xf32>
    %33 = vector.extract_strided_slice %7 {offsets = [0, 8], sizes = [8, 8], strides = [1, 1]} : vector<8x96xf32> to vector<8x8xf32>
    %34 = arith.truncf %33 : vector<8x8xf32> to vector<8x8xbf16>
    %35 = vector.extract_strided_slice %7 {offsets = [0, 40], sizes = [8, 8], strides = [1, 1]} : vector<8x96xf32> to vector<8x8xf32>
    %36 = arith.truncf %35 : vector<8x8xf32> to vector<8x8xbf16>
    %37 = vector.extract_strided_slice %7 {offsets = [0, 72], sizes = [8, 8], strides = [1, 1]} : vector<8x96xf32> to vector<8x8xf32>
    %38 = arith.truncf %37 : vector<8x8xf32> to vector<8x8xbf16>
    %cst_15 = arith.constant dense<0.000000e+00> : vector<8x8xf32>
    %39 = tpu.matmul %34, %36, %cst_15 {dimension_numbers = #tpu.dot_dimension_numbers<[1], [1], [0], [0], [0, 0, 1, 0], [], []>} : vector<8x8xbf16>, vector<8x8xbf16>, vector<8x8xf32> -> vector<8x8xf32>
    %cst_16 = arith.constant dense<0xFF800000> : vector<8xf32>
    %40 = vector.multi_reduction <maximumf>, %39, %cst_16 [1] : vector<8x8xf32> to vector<8xf32>
    %41 = vector.shape_cast %40 : vector<8xf32> to vector<8x1xf32>
    %42 = vector.broadcast %41 : vector<8x1xf32> to vector<8x8xf32>
    %43 = arith.subf %39, %42 : vector<8x8xf32>
    %44 = math.exp %43 : vector<8x8xf32>
    %cst_17 = arith.constant dense<0.000000e+00> : vector<8xf32>
    %45 = vector.multi_reduction <add>, %44, %cst_17 [1] : vector<8x8xf32> to vector<8xf32>
    %46 = vector.shape_cast %45 : vector<8xf32> to vector<8x1xf32>
    %47 = arith.truncf %44 : vector<8x8xf32> to vector<8x8xbf16>
    %cst_18 = arith.constant dense<0.000000e+00> : vector<8x8xf32>
    %48 = tpu.matmul %47, %38, %cst_18 {dimension_numbers = #tpu.dot_dimension_numbers<[1], [0], [0], [1], [0, 0, 1, 1], [], []>} : vector<8x8xbf16>, vector<8x8xbf16>, vector<8x8xf32> -> vector<8x8xf32>
    %49 = tpu.reciprocal %46 {approx = true} : vector<8x1xf32> -> vector<8x1xf32>
    %50 = vector.broadcast %49 : vector<8x1xf32> to vector<8x8xf32>
    %51 = arith.mulf %48, %50 : vector<8x8xf32>
    %52 = arith.truncf %51 : vector<8x8xf32> to vector<8x8xbf16>
    %c1 = arith.constant 1 : index
    %c0_19 = arith.constant 0 : index
    %c0_20 = arith.constant 0 : index
    %53 = vector.load %arg4[%c1, %c0_19, %c0_20] : memref<4x8x32xbf16, #tpu.memory_space<vmem>>, vector<1x8x32xbf16>
    %54 = vector.shape_cast %53 : vector<1x8x32xbf16> to vector<8x32xbf16>
    %cst_21 = arith.constant dense<0.000000e+00> : vector<8x32xf32>
    %55 = tpu.matmul %52, %54, %cst_21 {dimension_numbers = #tpu.dot_dimension_numbers<[1], [0], [0], [1], [0, 0, 1, 1], [], []>} : vector<8x8xbf16>, vector<8x32xbf16>, vector<8x32xf32> -> vector<8x32xf32>
    %56 = arith.addf %32, %55 : vector<8x32xf32>
    %57 = vector.extract_strided_slice %7 {offsets = [0, 16], sizes = [8, 8], strides = [1, 1]} : vector<8x96xf32> to vector<8x8xf32>
    %58 = arith.truncf %57 : vector<8x8xf32> to vector<8x8xbf16>
    %59 = vector.extract_strided_slice %7 {offsets = [0, 48], sizes = [8, 8], strides = [1, 1]} : vector<8x96xf32> to vector<8x8xf32>
    %60 = arith.truncf %59 : vector<8x8xf32> to vector<8x8xbf16>
    %61 = vector.extract_strided_slice %7 {offsets = [0, 80], sizes = [8, 8], strides = [1, 1]} : vector<8x96xf32> to vector<8x8xf32>
    %62 = arith.truncf %61 : vector<8x8xf32> to vector<8x8xbf16>
    %cst_22 = arith.constant dense<0.000000e+00> : vector<8x8xf32>
    %63 = tpu.matmul %58, %60, %cst_22 {dimension_numbers = #tpu.dot_dimension_numbers<[1], [1], [0], [0], [0, 0, 1, 0], [], []>} : vector<8x8xbf16>, vector<8x8xbf16>, vector<8x8xf32> -> vector<8x8xf32>
    %cst_23 = arith.constant dense<0xFF800000> : vector<8xf32>
    %64 = vector.multi_reduction <maximumf>, %63, %cst_23 [1] : vector<8x8xf32> to vector<8xf32>
    %65 = vector.shape_cast %64 : vector<8xf32> to vector<8x1xf32>
    %66 = vector.broadcast %65 : vector<8x1xf32> to vector<8x8xf32>
    %67 = arith.subf %63, %66 : vector<8x8xf32>
    %68 = math.exp %67 : vector<8x8xf32>
    %cst_24 = arith.constant dense<0.000000e+00> : vector<8xf32>
    %69 = vector.multi_reduction <add>, %68, %cst_24 [1] : vector<8x8xf32> to vector<8xf32>
    %70 = vector.shape_cast %69 : vector<8xf32> to vector<8x1xf32>
    %71 = arith.truncf %68 : vector<8x8xf32> to vector<8x8xbf16>
    %cst_25 = arith.constant dense<0.000000e+00> : vector<8x8xf32>
    %72 = tpu.matmul %71, %62, %cst_25 {dimension_numbers = #tpu.dot_dimension_numbers<[1], [0], [0], [1], [0, 0, 1, 1], [], []>} : vector<8x8xbf16>, vector<8x8xbf16>, vector<8x8xf32> -> vector<8x8xf32>
    %73 = tpu.reciprocal %70 {approx = true} : vector<8x1xf32> -> vector<8x1xf32>
    %74 = vector.broadcast %73 : vector<8x1xf32> to vector<8x8xf32>
    %75 = arith.mulf %72, %74 : vector<8x8xf32>
    %76 = arith.truncf %75 : vector<8x8xf32> to vector<8x8xbf16>
    %c2 = arith.constant 2 : index
    %c0_26 = arith.constant 0 : index
    %c0_27 = arith.constant 0 : index
    %77 = vector.load %arg4[%c2, %c0_26, %c0_27] : memref<4x8x32xbf16, #tpu.memory_space<vmem>>, vector<1x8x32xbf16>
    %78 = vector.shape_cast %77 : vector<1x8x32xbf16> to vector<8x32xbf16>
    %cst_28 = arith.constant dense<0.000000e+00> : vector<8x32xf32>
    %79 = tpu.matmul %76, %78, %cst_28 {dimension_numbers = #tpu.dot_dimension_numbers<[1], [0], [0], [1], [0, 0, 1, 1], [], []>} : vector<8x8xbf16>, vector<8x32xbf16>, vector<8x32xf32> -> vector<8x32xf32>
    %80 = arith.addf %56, %79 : vector<8x32xf32>
    %81 = vector.extract_strided_slice %7 {offsets = [0, 24], sizes = [8, 8], strides = [1, 1]} : vector<8x96xf32> to vector<8x8xf32>
    %82 = arith.truncf %81 : vector<8x8xf32> to vector<8x8xbf16>
    %83 = vector.extract_strided_slice %7 {offsets = [0, 56], sizes = [8, 8], strides = [1, 1]} : vector<8x96xf32> to vector<8x8xf32>
    %84 = arith.truncf %83 : vector<8x8xf32> to vector<8x8xbf16>
    %85 = vector.extract_strided_slice %7 {offsets = [0, 88], sizes = [8, 8], strides = [1, 1]} : vector<8x96xf32> to vector<8x8xf32>
    %86 = arith.truncf %85 : vector<8x8xf32> to vector<8x8xbf16>
    %cst_29 = arith.constant dense<0.000000e+00> : vector<8x8xf32>
    %87 = tpu.matmul %82, %84, %cst_29 {dimension_numbers = #tpu.dot_dimension_numbers<[1], [1], [0], [0], [0, 0, 1, 0], [], []>} : vector<8x8xbf16>, vector<8x8xbf16>, vector<8x8xf32> -> vector<8x8xf32>
    %cst_30 = arith.constant dense<0xFF800000> : vector<8xf32>
    %88 = vector.multi_reduction <maximumf>, %87, %cst_30 [1] : vector<8x8xf32> to vector<8xf32>
    %89 = vector.shape_cast %88 : vector<8xf32> to vector<8x1xf32>
    %90 = vector.broadcast %89 : vector<8x1xf32> to vector<8x8xf32>
    %91 = arith.subf %87, %90 : vector<8x8xf32>
    %92 = math.exp %91 : vector<8x8xf32>
    %cst_31 = arith.constant dense<0.000000e+00> : vector<8xf32>
    %93 = vector.multi_reduction <add>, %92, %cst_31 [1] : vector<8x8xf32> to vector<8xf32>
    %94 = vector.shape_cast %93 : vector<8xf32> to vector<8x1xf32>
    %95 = arith.truncf %92 : vector<8x8xf32> to vector<8x8xbf16>
    %cst_32 = arith.constant dense<0.000000e+00> : vector<8x8xf32>
    %96 = tpu.matmul %95, %86, %cst_32 {dimension_numbers = #tpu.dot_dimension_numbers<[1], [0], [0], [1], [0, 0, 1, 1], [], []>} : vector<8x8xbf16>, vector<8x8xbf16>, vector<8x8xf32> -> vector<8x8xf32>
    %97 = tpu.reciprocal %94 {approx = true} : vector<8x1xf32> -> vector<8x1xf32>
    %98 = vector.broadcast %97 : vector<8x1xf32> to vector<8x8xf32>
    %99 = arith.mulf %96, %98 : vector<8x8xf32>
    %100 = arith.truncf %99 : vector<8x8xf32> to vector<8x8xbf16>
    %c3 = arith.constant 3 : index
    %c0_33 = arith.constant 0 : index
    %c0_34 = arith.constant 0 : index
    %101 = vector.load %arg4[%c3, %c0_33, %c0_34] : memref<4x8x32xbf16, #tpu.memory_space<vmem>>, vector<1x8x32xbf16>
    %102 = vector.shape_cast %101 : vector<1x8x32xbf16> to vector<8x32xbf16>
    %cst_35 = arith.constant dense<0.000000e+00> : vector<8x32xf32>
    %103 = tpu.matmul %100, %102, %cst_35 {dimension_numbers = #tpu.dot_dimension_numbers<[1], [0], [0], [1], [0, 0, 1, 1], [], []>} : vector<8x8xbf16>, vector<8x32xbf16>, vector<8x32xf32> -> vector<8x32xf32>
    %104 = arith.addf %80, %103 : vector<8x32xf32>
    %c0_36 = arith.constant 0 : index
    %c0_37 = arith.constant 0 : index
    %105 = vector.load %arg5[%c0_36, %c0_37] : memref<1x32xf32, #tpu.memory_space<vmem>>, vector<1x32xf32>
    %106 = vector.broadcast %105 : vector<1x32xf32> to vector<8x32xf32>
    %107 = arith.addf %104, %106 : vector<8x32xf32>
    %108 = arith.addf %107, %1 : vector<8x32xf32>
    %c0_38 = arith.constant 0 : index
    %c0_39 = arith.constant 0 : index
    %c0_40 = arith.constant 0 : index
    %109 = vector.load %arg6[%c0_38, %c0_39, %c0_40] : memref<1x8x32xf32, #tpu.memory_space<vmem>>, vector<1x8x32xf32>
    %110 = vector.shape_cast %109 : vector<1x8x32xf32> to vector<8x32xf32>
    %111 = vector.shape_cast %108 : vector<8x32xf32> to vector<1x8x32xf32>
    tpu.vector_store %arg6[%c0_38, %c0_39, %c0_40], %111 {strides = array<i32>} : memref<1x8x32xf32, #tpu.memory_space<vmem>>, vector<1x8x32xf32>,
    return
  }
  func.func @transform_0(%arg0: i32) -> (i32, i32, i32) {
    %c0_i32 = arith.constant 0 : i32
    %c0_i32_0 = arith.constant 0 : i32
    %c0_i32_1 = arith.constant 0 : i32
    return %arg0, %c0_i32, %c0_i32_0 : i32, i32, i32
  }
  func.func @transform_1(%arg0: i32) -> (i32, i32) {
    %c0_i32 = arith.constant 0 : i32
    %c0_i32_0 = arith.constant 0 : i32
    %c0_i32_1 = arith.constant 0 : i32
    return %c0_i32, %c0_i32_0 : i32, i32
  }
  func.func @transform_2(%arg0: i32) -> (i32, i32) {
    %c0_i32 = arith.constant 0 : i32
    %c0_i32_0 = arith.constant 0 : i32
    %c0_i32_1 = arith.constant 0 : i32
    return %c0_i32, %c0_i32_0 : i32, i32
  }
  func.func @transform_3(%arg0: i32) -> (i32, i32, i32) {
    %c0_i32 = arith.constant 0 : i32
    %c0_i32_0 = arith.constant 0 : i32
    %c0_i32_1 = arith.constant 0 : i32
    %c0_i32_2 = arith.constant 0 : i32
    return %c0_i32, %c0_i32_0, %c0_i32_1 : i32, i32, i32
  }
  func.func @transform_4(%arg0: i32) -> (i32, i32) {
    %c0_i32 = arith.constant 0 : i32
    %c0_i32_0 = arith.constant 0 : i32
    %c0_i32_1 = arith.constant 0 : i32
    return %c0_i32, %c0_i32_0 : i32, i32
  }
  func.func @transform_5(%arg0: i32) -> (i32, i32, i32) {
    %c0_i32 = arith.constant 0 : i32
    %c0_i32_0 = arith.constant 0 : i32
    %c0_i32_1 = arith.constant 0 : i32
    return %arg0, %c0_i32, %c0_i32_0 : i32, i32, i32
  }
}

</mosaic_0001>

<llo_original>
// kernel: attention_block.1
$region0: #{attention_block.1}
  #allocation0 [shape = 'u32[]', space=smem, size = 0x4, offset = 0x4, fixed_abs, tag = 'smem constant byte address 0x4 - core index']
  #allocation1 [shape = 'u32[144,128]{1,0:T(1,128)}', space=vmem, size = 0x12000, scoped, tag = 'internal scratch']
  %s0 = inlined_call_operand.vmem [shape: f32[2,8,32], index: 0, kind: input, shape index: {}]
  %s1 = inlined_call_operand.vmem [shape: bf16[32,96], index: 1, kind: input, shape index: {}]
  %s2 = inlined_call_operand.vmem [shape: f32[1,96], index: 2, kind: input, shape index: {}]
  %s3 = inlined_call_operand.vmem [shape: bf16[4,8,32], index: 3, kind: input, shape index: {}]
  %s4 = inlined_call_operand.vmem [shape: f32[1,32], index: 4, kind: input, shape index: {}]
  %s5 = inlined_call_operand.vmem [shape: f32[2,8,32], index: 5, kind: output, shape index: {}]
  %s6 = sld [smem:[#allocation0]]
  $region53: #{attention_block.1} parent=0
    _
  %s8 = ssub.s32 1, %s6
  %s9 = scalar_select 0, %s8, %s6
  loop: start=0, step=1, limit=4
  $region2: #{attention_block.1} parent=0 // loop_pre_header
    _
  $region3: #{attention_block.1} parent=0 // loop_header
    %s11 = sphi 0, %s15
    %p12 = scmp.ge.s32.totalorder %s11, 4
    %s21 = sphi 0, %s23
    %s24 = sphi 0, %s21
    %s25 = sphi 0, %s24
    %s41 = sphi 0, %s25
    %s45 = sphi 0, %s45
    %s47 = sphi 0, %s45
    %s48 = sphi 0, %s47
    %s62 = sphi 0, %s48
    %s66 = sphi 0, %s66
    %s68 = sphi 0, %s66
    %s69 = sphi 0, %s68
    %s83 = sphi 0, %s69
    %s87 = sphi 0, %s87
    %s89 = sphi 0, %s87
    %s90 = sphi 0, %s89
    %s104 = sphi 0, %s90
    %s108 = sphi 0, %s108
    %s110 = sphi 0, %s108
    %s111 = sphi 0, %s110
    %s125 = sphi 0, %s111
    %s131 = sphi 0, %s133
    %s134 = sphi 0, %s131
    %s135 = sphi 0, %s134
    %s151 = sphi 0, %s135
  $region4: #{attention_block.1} parent=0 // loop_header_branch
    %14 = sbr.rel (%p12) target = $region8
  $region5: #{attention_block.1} parent=0 // loop_body
    %s16 = ssub.s32 %s11, 1
    %s17 = ssub.s32 %s11, 2
    %s18 = sadd.s32 %s11, 1
    %s19 = ssub.s32 %s11, %s18
    %p20 = scmp.eq.s32.totalorder %s19, 0
    %s22 = sadd.s32 %s21, 1
    %s23 = scalar_select %p20, %s21, %s22
    %p26 = pneg %p20
    %p27 = scmp.eq.s32.totalorder %s11, 1
    %p28 = por %p26, %p27
    %p29 = scmp.ne.s32.totalorder %s21, %s24
    %p30 = scmp.eq.s32.totalorder %s11, 0
    %p31 = por %p29, %p30
    %p32 = scmp.ne.s32.totalorder %s21, %s24
    %p33 = scmp.eq.s32.totalorder %s16, 1
    %p34 = por %p32, %p33
    %p35 = scmp.ne.s32.totalorder %s24, %s25
    %p36 = scmp.eq.s32.totalorder %s16, 0
    %p37 = por %p35, %p36
    %p38 = scmp.ne.s32.totalorder %s24, %s25
    %p39 = scmp.eq.s32.totalorder %s17, 1
    %p40 = por %p38, %p39
    %p42 = scmp.ne.s32.totalorder %s25, %s41
    %p43 = scmp.eq.s32.totalorder %s17, 0
    %p44 = por %p42, %p43
    %s46 = sadd.s32 %s45, 1
    %p49 = scmp.eq.s32.totalorder %s11, 1
    %p50 = scmp.ne.s32.totalorder %s45, %s47
    %p51 = scmp.eq.s32.totalorder %s11, 0
    %p52 = por %p50, %p51
    %p53 = scmp.ne.s32.totalorder %s45, %s47
    %p54 = scmp.eq.s32.totalorder %s16, 1
    %p55 = por %p53, %p54
    %p56 = scmp.ne.s32.totalorder %s47, %s48
    %p57 = scmp.eq.s32.totalorder %s16, 0
    %p58 = por %p56, %p57
    %p59 = scmp.ne.s32.totalorder %s47, %s48
    %p60 = scmp.eq.s32.totalorder %s17, 1
    %p61 = por %p59, %p60
    %p63 = scmp.ne.s32.totalorder %s48, %s62
    %p64 = scmp.eq.s32.totalorder %s17, 0
    %p65 = por %p63, %p64
    %s67 = sadd.s32 %s66, 1
    %p70 = scmp.eq.s32.totalorder %s11, 1
    %p71 = scmp.ne.s32.totalorder %s66, %s68
    %p72 = scmp.eq.s32.totalorder %s11, 0
    %p73 = por %p71, %p72
    %p74 = scmp.ne.s32.totalorder %s66, %s68
    %p75 = scmp.eq.s32.totalorder %s16, 1
    %p76 = por %p74, %p75
    %p77 = scmp.ne.s32.totalorder %s68, %s69
    %p78 = scmp.eq.s32.totalorder %s16, 0
    %p79 = por %p77, %p78
    %p80 = scmp.ne.s32.totalorder %s68, %s69
    %p81 = scmp.eq.s32.totalorder %s17, 1
    %p82 = por %p80, %p81
    %p84 = scmp.ne.s32.totalorder %s69, %s83
    %p85 = scmp.eq.s32.totalorder %s17, 0
    %p86 = por %p84, %p85
    %s88 = sadd.s32 %s87, 1
    %p91 = scmp.eq.s32.totalorder %s11, 1
    %p92 = scmp.ne.s32.totalorder %s87, %s89
    %p93 = scmp.eq.s32.totalorder %s11, 0
    %p94 = por %p92, %p93
    %p95 = scmp.ne.s32.totalorder %s87, %s89
    %p96 = scmp.eq.s32.totalorder %s16, 1
    %p97 = por %p95, %p96
    %p98 = scmp.ne.s32.totalorder %s89, %s90
    %p99 = scmp.eq.s32.totalorder %s16, 0
    %p100 = por %p98, %p99
    %p101 = scmp.ne.s32.totalorder %s89, %s90
    %p102 = scmp.eq.s32.totalorder %s17, 1
    %p103 = por %p101, %p102
    %p105 = scmp.ne.s32.totalorder %s90, %s104
    %p106 = scmp.eq.s32.totalorder %s17, 0
    %p107 = por %p105, %p106
    %s109 = sadd.s32 %s108, 1
    %p112 = scmp.eq.s32.totalorder %s11, 1
    %p113 = scmp.ne.s32.totalorder %s108, %s110
    %p114 = scmp.eq.s32.totalorder %s11, 0
    %p115 = por %p113, %p114
    %p116 = scmp.ne.s32.totalorder %s108, %s110
    %p117 = scmp.eq.s32.totalorder %s16, 1
    %p118 = por %p116, %p117
    %p119 = scmp.ne.s32.totalorder %s110, %s111
    %p120 = scmp.eq.s32.totalorder %s16, 0
    %p121 = por %p119, %p120
    %p122 = scmp.ne.s32.totalorder %s110, %s111
    %p123 = scmp.eq.s32.totalorder %s17, 1
    %p124 = por %p122, %p123
    %p126 = scmp.ne.s32.totalorder %s111, %s125
    %p127 = scmp.eq.s32.totalorder %s17, 0
    %p128 = por %p126, %p127
    %s129 = ssub.s32 %s11, %s18
    %p130 = scmp.eq.s32.totalorder %s129, 0
    %s132 = sadd.s32 %s131, 1
    %s133 = scalar_select %p130, %s131, %s132
    %p136 = pneg %p130
    %p137 = scmp.eq.s32.totalorder %s11, 1
    %p138 = por %p136, %p137
    %p139 = scmp.ne.s32.totalorder %s131, %s134
    %p140 = scmp.eq.s32.totalorder %s11, 0
    %p141 = por %p139, %p140
    %p142 = scmp.ne.s32.totalorder %s131, %s134
    %p143 = scmp.eq.s32.totalorder %s16, 1
    %p144 = por %p142, %p143
    %p145 = scmp.ne.s32.totalorder %s134, %s135
    %p146 = scmp.eq.s32.totalorder %s16, 0
    %p147 = por %p145, %p146
    %p148 = scmp.ne.s32.totalorder %s134, %s135
    %p149 = scmp.eq.s32.totalorder %s17, 1
    %p150 = por %p148, %p149
    %p152 = scmp.ne.s32.totalorder %s135, %s151
    %p153 = scmp.eq.s32.totalorder %s17, 0
    %p154 = por %p152, %p153
    %p155 = scmp.le.s32.totalorder 1, %s11
    %p156 = scmp.lt.s32.totalorder %s11, 3
    %p157 = pnand %p155, %p156
    %p158 = pneg %p157
    // Predicated region
    $region9: #{attention_block.1} parent=5 // pred_check
      _
    $region10: #{attention_block.1} parent=5 // pred_check_branch
      %160 = sbr.rel (%p157) target = $region12
    $region11: #{attention_block.1} parent=5 // pred_region
      %s161 = ssub.s32 %s11, 1
      // Predicated region
      $region13: #{attention_block.1} parent=11 // pred_check
        %p162 = pneg %p58
      $region14: #{attention_block.1} parent=11 // pred_check_branch
        %164 = sbr.rel (%p162) target = $region16
      $region15: #{attention_block.1} parent=11 // pred_region
        _
      $region16: #{attention_block.1} parent=11 // pred_fallthru
        _
      // Predicated region
      $region17: #{attention_block.1} parent=11 // pred_check
        %p165 = pneg %p79
      $region18: #{attention_block.1} parent=11 // pred_check_branch
        %167 = sbr.rel (%p165) target = $region20
      $region19: #{attention_block.1} parent=11 // pred_region
        _
      $region20: #{attention_block.1} parent=11 // pred_fallthru
        _
      // Predicated region
      $region21: #{attention_block.1} parent=11 // pred_check
        %p168 = pneg %p100
      $region22: #{attention_block.1} parent=11 // pred_check_branch
        %170 = sbr.rel (%p168) target = $region24
      $region23: #{attention_block.1} parent=11 // pred_region
        _
      $region24: #{attention_block.1} parent=11 // pred_fallthru
        _
      // Predicated region
      $region25: #{attention_block.1} parent=11 // pred_check
        %p171 = pneg %p121
      $region26: #{attention_block.1} parent=11 // pred_check_branch
        %173 = sbr.rel (%p171) target = $region28
      $region27: #{attention_block.1} parent=11 // pred_region
        _
      $region28: #{attention_block.1} parent=11 // pred_fallthru
        _
    $region12: #{attention_block.1} parent=5 // pred_fallthru
      _
    %p174 = scmp.lt.s32.totalorder %s11, 2
    // Predicated region
    $region29: #{attention_block.1} parent=5 // pred_check
      %p175 = pneg %p174
    $region30: #{attention_block.1} parent=5 // pred_check_branch
      %177 = sbr.rel (%p175) target = $region32
    $region31: #{attention_block.1} parent=5 // pred_region
      // Predicated region
      $region33: #{attention_block.1} parent=31 // pred_check
        %p178 = pneg %p31
      $region34: #{attention_block.1} parent=31 // pred_check_branch
        %180 = sbr.rel (%p178) target = $region36
      $region35: #{attention_block.1} parent=31 // pred_region
        %p181 = scmp.lt.s32.totalorder %s11, 1
        %s182 = scalar_select %p181, %s11, 1
        %s183 = smul.addr %s182, 8
        %s184 = scalar_lea.vmem %s0, %s183
      $region36: #{attention_block.1} parent=31 // pred_fallthru
        _
    $region32: #{attention_block.1} parent=5 // pred_fallthru
      _
    %p185 = scmp.le.s32.totalorder 1, %s11
    %p186 = scmp.lt.s32.totalorder %s11, 3
    %p187 = pnand %p185, %p186
    %p188 = pneg %p187
    // Predicated region
    $region37: #{attention_block.1} parent=5 // pred_check
      _
    $region38: #{attention_block.1} parent=5 // pred_check_branch
      %190 = sbr.rel (%p187) target = $region40
    $region39: #{attention_block.1} parent=5 // pred_region
      %s191 = ssub.s32 %s11, 1
      %p192 = scmp.lt.s32.totalorder %s16, 1
      %s193 = scalar_select %p192, %s16, 1
      %s194 = smul.addr %s193, 8
      %s195 = scalar_lea.vmem %s0, %s194
      %p196 = pneg %p37
      %p197 = pneg %p34
      %p198 = pneg %p58
      %p199 = pneg %p55
      %p200 = pneg %p79
      %p201 = pneg %p76
      %p202 = pneg %p100
      %p203 = pneg %p97
      %p204 = pneg %p121
      %p205 = pneg %p118
      %p206 = pneg %p147
      %p207 = pneg %p144
      %p208 = scmp.lt.s32.totalorder %s16, 1
      %s209 = scalar_select %p208, %s16, 1
      %s210 = smul.addr %s209, 8
      %s211 = scalar_lea.vmem %s5, %s210
      %p212 = scmp.lt.s32.totalorder %s16, 1
      %s213 = scalar_select %p212, %s16, 1
      %s214 = smul.addr %s213, 8
      %s215 = scalar_lea.vmem %s0, %s214
      %p216 = scmp.lt.s32.totalorder %s16, 1
      %s217 = scalar_select %p216, %s16, 1
      %s218 = smul.addr %s217, 8
      %s219 = scalar_lea.vmem %s5, %s218
      %v221 = vld [vmem:[%s215] sm:$0xff]
      %v222 = vpack.c.bf16 %v221, %v221
      %v223 = vld [vmem:[%s1] sm:$0xf]
      %v224 = vld [vmem:[%s1 + $0x4] sm:$0xf]
      %v225 = vld [vmem:[%s1 + $0x8] sm:$0xf]
      %v226 = vld [vmem:[%s1 + $0xc] sm:$0xf]
      %v227 = vld [vmem:[%s2] sm:$0x1]
      %v229 = vlaneseq
      %v230 = vshrl.u32 %v229, 7
      %v231 = vsub.s32 0, %v230
      %v232 = vrot.slane %v227, %v231
      %v238 = vunpack.c.l.b16 %v223
      %v239 = vunpack.c.l.b16 %v224
      %v240 = vunpack.c.l.b16 %v225
      %v241 = vunpack.c.l.b16 %v226
      %v242 = vpack.c.b16 %v239, %v238
      %v243 = vpack.c.b16 %v241, %v240
      %vm246 = vcmask 261120
      %v248 = vsel %vm246, %v222, 0
      %250 = vmatprep.subr.bf16.mxu0 0
      %251 = vmatpush1.bf16.msra.mxu0 0
      %252 = vmatprep.subr.bf16.mxu0 0
      %253 = vmatpush1.bf16.msra.mxu0 0
      %254 = vmatprep.subr.bf16.mxu0 0
      %255 = vmatpush1.bf16.msra.mxu0 0
      %256 = vmatprep.subr.bf16.mxu0 0
      %257 = vmatpush1.bf16.msra.mxu0 0
      %258 = vmatprep.subr.bf16.mxu0 0
      %259 = vmatpush1.bf16.msra.mxu0 0
      %260 = vmatprep.subr.bf16.mxu0 0
      %261 = vmatpush1.bf16.msra.mxu0 0
      %262 = vmatprep.subr.bf16.mxu0 0
      %263 = vmatpush1.bf16.msra.mxu0 %v243
      %264 = vmatprep.subr.bf16.mxu0 0
      %265 = vmatpush1.bf16.msra.mxu0 %v242
      %266 = vmatprep.subr.bf16.mxu0 0
      %267 = vmatpush2.bf16.msra.mxu0 0
      %268 = vmatprep.subr.bf16.mxu0 0
      %269 = vmatpush2.bf16.msra.mxu0 0
      %270 = vmatprep.subr.bf16.mxu0 0
      %271 = vmatpush2.bf16.msra.mxu0 0
      %272 = vmatprep.subr.bf16.mxu0 0
      %273 = vmatpush2.bf16.msra.mxu0 0
      %274 = vmatprep.subr.bf16.mxu0 0
      %275 = vmatpush2.bf16.msra.mxu0 0
      %276 = vmatprep.subr.bf16.mxu0 0
      %277 = vmatpush2.bf16.msra.mxu0 0
      %278 = vmatprep.subr.bf16.mxu0 0
      %279 = vmatpush2.bf16.msra.mxu0 0
      %280 = vmatprep.subr.bf16.mxu0 0
      %281 = vmatpush2.bf16.msra.mxu0 0
      %282 = vmatprep.mubr.bf16.mxu0 0
      %283 = vmatmul.mubr.bf16.gmra.mxu0 %v248
      %v284 = vpop.f32.mrf.mxu0
      %v285 = vadd.f32 %v232, %v284
      %v286 = vpop.f32.mrf.mxu0
      %v287 = vpop.f32.mrf.mxu0
      %v288 = vpop.f32.mrf.mxu0
      %289 = vdwg.mxu0
      %v290 = vpack.c.bf16 %v285, %v285
      %292 = vrot.lane.b32.xlu0 %v290, 96
      %v293 = vpop.permute.xlu0 %292
      %vm294 = vcmask 64512
      %v296 = vsel %vm294, %v290, 0
      %v299 = vsel %vm294, %v293, 0
      %301 = vmatprep.subr.bf16.mxu0 0
      %302 = vmatpush1.bf16.xpose.msra.mxu0 0
      %303 = vmatprep.subr.bf16.mxu0 0
      %304 = vmatpush1.bf16.xpose.msra.mxu0 0
      %305 = vmatprep.subr.bf16.mxu0 0
      %306 = vmatpush1.bf16.xpose.msra.mxu0 0
      %307 = vmatprep.subr.bf16.mxu0 0
      %308 = vmatpush1.bf16.xpose.msra.mxu0 0
      %309 = vmatprep.subr.bf16.mxu0 0
      %310 = vmatpush1.bf16.xpose.msra.mxu0 0
      %311 = vmatprep.subr.bf16.mxu0 0
      %312 = vmatpush1.bf16.xpose.msra.mxu0 0
      %313 = vmatprep.subr.bf16.mxu0 0
      %314 = vmatpush1.bf16.xpose.msra.mxu0 0
      %315 = vmatprep.subr.bf16.mxu0 0
      %316 = vmatpush1.bf16.xpose.msra.mxu0 %v299
      %317 = vmatprep.subr.bf16.mxu0 0
      %318 = vmatpush2.bf16.xpose.msra.mxu0 0
      %319 = vmatprep.subr.bf16.mxu0 0
      %320 = vmatpush2.bf16.xpose.msra.mxu0 0
      %321 = vmatprep.subr.bf16.mxu0 0
      %322 = vmatpush2.bf16.xpose.msra.mxu0 0
      %323 = vmatprep.subr.bf16.mxu0 0
      %324 = vmatpush2.bf16.xpose.msra.mxu0 0
      %325 = vmatprep.subr.bf16.mxu0 0
      %326 = vmatpush2.bf16.xpose.msra.mxu0 0
      %327 = vmatprep.subr.bf16.mxu0 0
      %328 = vmatpush2.bf16.xpose.msra.mxu0 0
      %329 = vmatprep.subr.bf16.mxu0 0
      %330 = vmatpush2.bf16.xpose.msra.mxu0 0
      %331 = vmatprep.subr.bf16.mxu0 0
      %332 = vmatpush2.bf16.xpose.msra.mxu0 0
      %333 = vmatprep.mubr.bf16.mxu0 0
      %334 = vmatmul.mubr.bf16.gmra.mxu0 %v296
      %v335 = vpop.f32.mrf.mxu0
      %v336 = vadd.f32 0.0, %v335
      %v337 = vpop.f32.mrf.mxu0
      %v338 = vpop.f32.mrf.mxu0
      %v339 = vpop.f32.mrf.mxu0
      %340 = vdwg.mxu0
      %v341 = vsel %vm294, %v336, -inf
      %342 = vmax.xlane.f32.xlu0 %v341
      %v343 = vpop.xlane.xlu0 %342
      %v344 = vsub.f32 %v336, %v343
      %v345 = vmul.f32 %v344, 1.442695
      %v346 = vpow.pop %v345
      %v347 = vsel %vm294, %v346, 0.0
      %348 = vadd.xlane.f32.xlu0 %v347
      %v349 = vpop.xlane.xlu0 %348
      %v350 = vpack.c.bf16 %v346, %v346
      %351 = vrot.lane.b32.xlu0 %v290, 64
      %v352 = vpop.permute.xlu0 %351
      %v354 = vsel %vm294, %v350, 0
      %vm356 = vcmask 1043456
      %v358 = vsel %vm356, %v352, 0
      %360 = vmatprep.subr.bf16.mxu0 0
      %361 = vmatpush1.bf16.msra.mxu0 0
      %362 = vmatprep.subr.bf16.mxu0 0
      %363 = vmatpush1.bf16.msra.mxu0 0
      %364 = vmatprep.subr.bf16.mxu0 0
      %365 = vmatpush1.bf16.msra.mxu0 0
      %366 = vmatprep.subr.bf16.mxu0 0
      %367 = vmatpush1.bf16.msra.mxu0 0
      %368 = vmatprep.subr.bf16.mxu0 0
      %369 = vmatpush1.bf16.msra.mxu0 0
      %370 = vmatprep.subr.bf16.mxu0 0
      %371 = vmatpush1.bf16.msra.mxu0 0
      %372 = vmatprep.subr.bf16.mxu0 0
      %373 = vmatpush1.bf16.msra.mxu0 0
      %374 = vmatprep.subr.bf16.mxu0 0
      %375 = vmatpush1.bf16.msra.mxu0 %v358
      %376 = vmatprep.subr.bf16.mxu0 0
      %377 = vmatpush2.bf16.msra.mxu0 0
      %378 = vmatprep.subr.bf16.mxu0 0
      %379 = vmatpush2.bf16.msra.mxu0 0
      %380 = vmatprep.subr.bf16.mxu0 0
      %381 = vmatpush2.bf16.msra.mxu0 0
      %382 = vmatprep.subr.bf16.mxu0 0
      %383 = vmatpush2.bf16.msra.mxu0 0
      %384 = vmatprep.subr.bf16.mxu0 0
      %385 = vmatpush2.bf16.msra.mxu0 0
      %386 = vmatprep.subr.bf16.mxu0 0
      %387 = vmatpush2.bf16.msra.mxu0 0
      %388 = vmatprep.subr.bf16.mxu0 0
      %389 = vmatpush2.bf16.msra.mxu0 0
      %390 = vmatprep.subr.bf16.mxu0 0
      %391 = vmatpush2.bf16.msra.mxu0 0
      %392 = vmatprep.mubr.bf16.mxu0 0
      %393 = vmatmul.mubr.bf16.gmra.mxu0 %v354
      %v394 = vpop.f32.mrf.mxu0
      %v395 = vadd.f32 0.0, %v394
      %v396 = vpop.f32.mrf.mxu0
      %v397 = vpop.f32.mrf.mxu0
      %v398 = vpop.f32.mrf.mxu0
      %399 = vdwg.mxu0
      %v400 = vrcp.pop %v349
      %v401 = vmul.f32 %v395, %v400
      %v402 = vpack.c.bf16 %v401, %v401
      %v403 = vld [vmem:[%s3] sm:$0xf]
      %404 = vrot.lane.b32.xlu0 %v290, 120
      %v405 = vpop.permute.xlu0 %404
      %406 = vrot.lane.b32.xlu0 %v290, 88
      %v407 = vpop.permute.xlu0 %406
      %v409 = vsel %vm294, %v405, 0
      %v412 = vsel %vm294, %v407, 0
      %414 = vmatprep.subr.bf16.mxu0 0
      %415 = vmatpush1.bf16.xpose.msra.mxu0 0
      %416 = vmatprep.subr.bf16.mxu0 0
      %417 = vmatpush1.bf16.xpose.msra.mxu0 0
      %418 = vmatprep.subr.bf16.mxu0 0
      %419 = vmatpush1.bf16.xpose.msra.mxu0 0
      %420 = vmatprep.subr.bf16.mxu0 0
      %421 = vmatpush1.bf16.xpose.msra.mxu0 0
      %422 = vmatprep.subr.bf16.mxu0 0
      %423 = vmatpush1.bf16.xpose.msra.mxu0 0
      %424 = vmatprep.subr.bf16.mxu0 0
      %425 = vmatpush1.bf16.xpose.msra.mxu0 0
      %426 = vmatprep.subr.bf16.mxu0 0
      %427 = vmatpush1.bf16.xpose.msra.mxu0 0
      %428 = vmatprep.subr.bf16.mxu0 0
      %429 = vmatpush1.bf16.xpose.msra.mxu0 %v412
      %430 = vmatprep.subr.bf16.mxu0 0
      %431 = vmatpush2.bf16.xpose.msra.mxu0 0
      %432 = vmatprep.subr.bf16.mxu0 0
      %433 = vmatpush2.bf16.xpose.msra.mxu0 0
      %434 = vmatprep.subr.bf16.mxu0 0
      %435 = vmatpush2.bf16.xpose.msra.mxu0 0
      %436 = vmatprep.subr.bf16.mxu0 0
      %437 = vmatpush2.bf16.xpose.msra.mxu0 0
      %438 = vmatprep.subr.bf16.mxu0 0
      %439 = vmatpush2.bf16.xpose.msra.mxu0 0
      %440 = vmatprep.subr.bf16.mxu0 0
      %441 = vmatpush2.bf16.xpose.msra.mxu0 0
      %442 = vmatprep.subr.bf16.mxu0 0
      %443 = vmatpush2.bf16.xpose.msra.mxu0 0
      %444 = vmatprep.subr.bf16.mxu0 0
      %445 = vmatpush2.bf16.xpose.msra.mxu0 0
      %446 = vmatprep.mubr.bf16.mxu0 0
      %447 = vmatmul.mubr.bf16.gmra.mxu0 %v409
      %v448 = vpop.f32.mrf.mxu0
      %v449 = vadd.f32 0.0, %v448
      %v450 = vpop.f32.mrf.mxu0
      %v451 = vpop.f32.mrf.mxu0
      %v452 = vpop.f32.mrf.mxu0
      %453 = vdwg.mxu0
      %v454 = vsel %vm294, %v449, -inf
      %455 = vmax.xlane.f32.xlu0 %v454
      %v456 = vpop.xlane.xlu0 %455
      %v457 = vsub.f32 %v449, %v456
      %v458 = vmul.f32 %v457, 1.442695
      %v459 = vpow.pop %v458
      %v460 = vsel %vm294, %v459, 0.0
      %461 = vadd.xlane.f32.xlu0 %v460
      %v462 = vpop.xlane.xlu0 %461
      %v463 = vpack.c.bf16 %v459, %v459
      %464 = vrot.lane.b32.xlu0 %v290, 56
      %v465 = vpop.permute.xlu0 %464
      %v467 = vsel %vm294, %v463, 0
      %v470 = vsel %vm356, %v465, 0
      %472 = vmatprep.subr.bf16.mxu0 0
      %473 = vmatpush1.bf16.msra.mxu0 0
      %474 = vmatprep.subr.bf16.mxu0 0
      %475 = vmatpush1.bf16.msra.mxu0 0
      %476 = vmatprep.subr.bf16.mxu0 0
      %477 = vmatpush1.bf16.msra.mxu0 0
      %478 = vmatprep.subr.bf16.mxu0 0
      %479 = vmatpush1.bf16.msra.mxu0 0
      %480 = vmatprep.subr.bf16.mxu0 0
      %481 = vmatpush1.bf16.msra.mxu0 0
      %482 = vmatprep.subr.bf16.mxu0 0
      %483 = vmatpush1.bf16.msra.mxu0 0
      %484 = vmatprep.subr.bf16.mxu0 0
      %485 = vmatpush1.bf16.msra.mxu0 0
      %486 = vmatprep.subr.bf16.mxu0 0
      %487 = vmatpush1.bf16.msra.mxu0 %v470
      %488 = vmatprep.subr.bf16.mxu0 0
      %489 = vmatpush2.bf16.msra.mxu0 0
      %490 = vmatprep.subr.bf16.mxu0 0
      %491 = vmatpush2.bf16.msra.mxu0 0
      %492 = vmatprep.subr.bf16.mxu0 0
      %493 = vmatpush2.bf16.msra.mxu0 0
      %494 = vmatprep.subr.bf16.mxu0 0
      %495 = vmatpush2.bf16.msra.mxu0 0
      %496 = vmatprep.subr.bf16.mxu0 0
      %497 = vmatpush2.bf16.msra.mxu0 0
      %498 = vmatprep.subr.bf16.mxu0 0
      %499 = vmatpush2.bf16.msra.mxu0 0
      %500 = vmatprep.subr.bf16.mxu0 0
      %501 = vmatpush2.bf16.msra.mxu0 0
      %502 = vmatprep.subr.bf16.mxu0 0
      %503 = vmatpush2.bf16.msra.mxu0 0
      %504 = vmatprep.mubr.bf16.mxu0 0
      %505 = vmatmul.mubr.bf16.gmra.mxu0 %v467
      %v506 = vpop.f32.mrf.mxu0
      %v507 = vadd.f32 0.0, %v506
      %v508 = vpop.f32.mrf.mxu0
      %v509 = vpop.f32.mrf.mxu0
      %v510 = vpop.f32.mrf.mxu0
      %511 = vdwg.mxu0
      %v512 = vrcp.pop %v462
      %v513 = vmul.f32 %v507, %v512
      %v514 = vpack.c.bf16 %v513, %v513
      %s515 = scalar_lea.vmem %s3, 4
      %v516 = vld [vmem:[%s515] sm:$0xf]
      %v518 = vsel %vm294, %v514, 0
      %v521 = vsel %vm356, %v516, 0
      %523 = vmatprep.subr.bf16.mxu0 0
      %524 = vmatpush1.bf16.msra.mxu0 0
      %525 = vmatprep.subr.bf16.mxu0 0
      %526 = vmatpush1.bf16.msra.mxu0 0
      %527 = vmatprep.subr.bf16.mxu0 0
      %528 = vmatpush1.bf16.msra.mxu0 0
      %529 = vmatprep.subr.bf16.mxu0 0
      %530 = vmatpush1.bf16.msra.mxu0 0
      %531 = vmatprep.subr.bf16.mxu0 0
      %532 = vmatpush1.bf16.msra.mxu0 0
      %533 = vmatprep.subr.bf16.mxu0 0
      %534 = vmatpush1.bf16.msra.mxu0 0
      %535 = vmatprep.subr.bf16.mxu0 0
      %536 = vmatpush1.bf16.msra.mxu0 0
      %537 = vmatprep.subr.bf16.mxu0 0
      %538 = vmatpush1.bf16.msra.mxu0 %v521
      %539 = vmatprep.subr.bf16.mxu0 0
      %540 = vmatpush2.bf16.msra.mxu0 0
      %541 = vmatprep.subr.bf16.mxu0 0
      %542 = vmatpush2.bf16.msra.mxu0 0
      %543 = vmatprep.subr.bf16.mxu0 0
      %544 = vmatpush2.bf16.msra.mxu0 0
      %545 = vmatprep.subr.bf16.mxu0 0
      %546 = vmatpush2.bf16.msra.mxu0 0
      %547 = vmatprep.subr.bf16.mxu0 0
      %548 = vmatpush2.bf16.msra.mxu0 0
      %549 = vmatprep.subr.bf16.mxu0 0
      %550 = vmatpush2.bf16.msra.mxu0 0
      %551 = vmatprep.subr.bf16.mxu0 0
      %552 = vmatpush2.bf16.msra.mxu0 0
      %553 = vmatprep.subr.bf16.mxu0 0
      %554 = vmatpush2.bf16.msra.mxu0 0
      %555 = vmatprep.mubr.bf16.mxu0 0
      %556 = vmatmul.mubr.bf16.gmra.mxu0 %v518
      %v557 = vpop.f32.mrf.mxu0
      %v558 = vadd.f32 0.0, %v557
      %v559 = vpop.f32.mrf.mxu0
      %v560 = vpop.f32.mrf.mxu0
      %v561 = vpop.f32.mrf.mxu0
      %562 = vdwg.mxu0
      %v564 = vsel %vm294, %v402, 0
      %v567 = vsel %vm356, %v403, 0
      %569 = vmatprep.subr.bf16.mxu0 0
      %570 = vmatpush1.bf16.msra.mxu0 0
      %571 = vmatprep.subr.bf16.mxu0 0
      %572 = vmatpush1.bf16.msra.mxu0 0
      %573 = vmatprep.subr.bf16.mxu0 0
      %574 = vmatpush1.bf16.msra.mxu0 0
      %575 = vmatprep.subr.bf16.mxu0 0
      %576 = vmatpush1.bf16.msra.mxu0 0
      %577 = vmatprep.subr.bf16.mxu0 0
      %578 = vmatpush1.bf16.msra.mxu0 0
      %579 = vmatprep.subr.bf16.mxu0 0
      %580 = vmatpush1.bf16.msra.mxu0 0
      %581 = vmatprep.subr.bf16.mxu0 0
      %582 = vmatpush1.bf16.msra.mxu0 0
      %583 = vmatprep.subr.bf16.mxu0 0
      %584 = vmatpush1.bf16.msra.mxu0 %v567
      %585 = vmatprep.subr.bf16.mxu0 0
      %586 = vmatpush2.bf16.msra.mxu0 0
      %587 = vmatprep.subr.bf16.mxu0 0
      %588 = vmatpush2.bf16.msra.mxu0 0
      %589 = vmatprep.subr.bf16.mxu0 0
      %590 = vmatpush2.bf16.msra.mxu0 0
      %591 = vmatprep.subr.bf16.mxu0 0
      %592 = vmatpush2.bf16.msra.mxu0 0
      %593 = vmatprep.subr.bf16.mxu0 0
      %594 = vmatpush2.bf16.msra.mxu0 0
      %595 = vmatprep.subr.bf16.mxu0 0
      %596 = vmatpush2.bf16.msra.mxu0 0
      %597 = vmatprep.subr.bf16.mxu0 0
      %598 = vmatpush2.bf16.msra.mxu0 0
      %599 = vmatprep.subr.bf16.mxu0 0
      %600 = vmatpush2.bf16.msra.mxu0 0
      %601 = vmatprep.mubr.bf16.mxu0 0
      %602 = vmatmul.mubr.bf16.gmra.mxu0 %v564
      %v603 = vpop.f32.mrf.mxu0
      %v604 = vadd.f32 %v558, %v603
      %v605 = vpop.f32.mrf.mxu0
      %v606 = vpop.f32.mrf.mxu0
      %v607 = vpop.f32.mrf.mxu0
      %608 = vdwg.mxu0
      %609 = vrot.lane.b32.xlu0 %v290, 112
      %v610 = vpop.permute.xlu0 %609
      %611 = vrot.lane.b32.xlu0 %v290, 80
      %v612 = vpop.permute.xlu0 %611
      %v614 = vsel %vm294, %v610, 0
      %v617 = vsel %vm294, %v612, 0
      %619 = vmatprep.subr.bf16.mxu0 0
      %620 = vmatpush1.bf16.xpose.msra.mxu0 0
      %621 = vmatprep.subr.bf16.mxu0 0
      %622 = vmatpush1.bf16.xpose.msra.mxu0 0
      %623 = vmatprep.subr.bf16.mxu0 0
      %624 = vmatpush1.bf16.xpose.msra.mxu0 0
      %625 = vmatprep.subr.bf16.mxu0 0
      %626 = vmatpush1.bf16.xpose.msra.mxu0 0
      %627 = vmatprep.subr.bf16.mxu0 0
      %628 = vmatpush1.bf16.xpose.msra.mxu0 0
      %629 = vmatprep.subr.bf16.mxu0 0
      %630 = vmatpush1.bf16.xpose.msra.mxu0 0
      %631 = vmatprep.subr.bf16.mxu0 0
      %632 = vmatpush1.bf16.xpose.msra.mxu0 0
      %633 = vmatprep.subr.bf16.mxu0 0
      %634 = vmatpush1.bf16.xpose.msra.mxu0 %v617
      %635 = vmatprep.subr.bf16.mxu0 0
      %636 = vmatpush2.bf16.xpose.msra.mxu0 0
      %637 = vmatprep.subr.bf16.mxu0 0
      %638 = vmatpush2.bf16.xpose.msra.mxu0 0
      %639 = vmatprep.subr.bf16.mxu0 0
      %640 = vmatpush2.bf16.xpose.msra.mxu0 0
      %641 = vmatprep.subr.bf16.mxu0 0
      %642 = vmatpush2.bf16.xpose.msra.mxu0 0
      %643 = vmatprep.subr.bf16.mxu0 0
      %644 = vmatpush2.bf16.xpose.msra.mxu0 0
      %645 = vmatprep.subr.bf16.mxu0 0
      %646 = vmatpush2.bf16.xpose.msra.mxu0 0
      %647 = vmatprep.subr.bf16.mxu0 0
      %648 = vmatpush2.bf16.xpose.msra.mxu0 0
      %649 = vmatprep.subr.bf16.mxu0 0
      %650 = vmatpush2.bf16.xpose.msra.mxu0 0
      %651 = vmatprep.mubr.bf16.mxu0 0
      %652 = vmatmul.mubr.bf16.gmra.mxu0 %v614
      %v653 = vpop.f32.mrf.mxu0
      %v654 = vadd.f32 0.0, %v653
      %v655 = vpop.f32.mrf.mxu0
      %v656 = vpop.f32.mrf.mxu0
      %v657 = vpop.f32.mrf.mxu0
      %658 = vdwg.mxu0
      %v659 = vsel %vm294, %v654, -inf
      %660 = vmax.xlane.f32.xlu0 %v659
      %v661 = vpop.xlane.xlu0 %660
      %v662 = vsub.f32 %v654, %v661
      %v663 = vmul.f32 %v662, 1.442695
      %v664 = vpow.pop %v663
      %v665 = vsel %vm294, %v664, 0.0
      %666 = vadd.xlane.f32.xlu0 %v665
      %v667 = vpop.xlane.xlu0 %666
      %v668 = vpack.c.bf16 %v664, %v664
      %669 = vrot.lane.b32.xlu0 %v290, 48
      %v670 = vpop.permute.xlu0 %669
      %v672 = vsel %vm294, %v668, 0
      %v675 = vsel %vm356, %v670, 0
      %677 = vmatprep.subr.bf16.mxu0 0
      %678 = vmatpush1.bf16.msra.mxu0 0
      %679 = vmatprep.subr.bf16.mxu0 0
      %680 = vmatpush1.bf16.msra.mxu0 0
      %681 = vmatprep.subr.bf16.mxu0 0
      %682 = vmatpush1.bf16.msra.mxu0 0
      %683 = vmatprep.subr.bf16.mxu0 0
      %684 = vmatpush1.bf16.msra.mxu0 0
      %685 = vmatprep.subr.bf16.mxu0 0
      %686 = vmatpush1.bf16.msra.mxu0 0
      %687 = vmatprep.subr.bf16.mxu0 0
      %688 = vmatpush1.bf16.msra.mxu0 0
      %689 = vmatprep.subr.bf16.mxu0 0
      %690 = vmatpush1.bf16.msra.mxu0 0
      %691 = vmatprep.subr.bf16.mxu0 0
      %692 = vmatpush1.bf16.msra.mxu0 %v675
      %693 = vmatprep.subr.bf16.mxu0 0
      %694 = vmatpush2.bf16.msra.mxu0 0
      %695 = vmatprep.subr.bf16.mxu0 0
      %696 = vmatpush2.bf16.msra.mxu0 0
      %697 = vmatprep.subr.bf16.mxu0 0
      %698 = vmatpush2.bf16.msra.mxu0 0
      %699 = vmatprep.subr.bf16.mxu0 0
      %700 = vmatpush2.bf16.msra.mxu0 0
      %701 = vmatprep.subr.bf16.mxu0 0
      %702 = vmatpush2.bf16.msra.mxu0 0
      %703 = vmatprep.subr.bf16.mxu0 0
      %704 = vmatpush2.bf16.msra.mxu0 0
      %705 = vmatprep.subr.bf16.mxu0 0
      %706 = vmatpush2.bf16.msra.mxu0 0
      %707 = vmatprep.subr.bf16.mxu0 0
      %708 = vmatpush2.bf16.msra.mxu0 0
      %709 = vmatprep.mubr.bf16.mxu0 0
      %710 = vmatmul.mubr.bf16.gmra.mxu0 %v672
      %v711 = vpop.f32.mrf.mxu0
      %v712 = vadd.f32 0.0, %v711
      %v713 = vpop.f32.mrf.mxu0
      %v714 = vpop.f32.mrf.mxu0
      %v715 = vpop.f32.mrf.mxu0
      %716 = vdwg.mxu0
      %v717 = vrcp.pop %v667
      %v718 = vmul.f32 %v712, %v717
      %v719 = vpack.c.bf16 %v718, %v718
      %s720 = scalar_lea.vmem %s3, 8
      %v721 = vld [vmem:[%s720] sm:$0xf]
      %v723 = vsel %vm294, %v719, 0
      %v726 = vsel %vm356, %v721, 0
      %728 = vmatprep.subr.bf16.mxu0 0
      %729 = vmatpush1.bf16.msra.mxu0 0
      %730 = vmatprep.subr.bf16.mxu0 0
      %731 = vmatpush1.bf16.msra.mxu0 0
      %732 = vmatprep.subr.bf16.mxu0 0
      %733 = vmatpush1.bf16.msra.mxu0 0
      %734 = vmatprep.subr.bf16.mxu0 0
      %735 = vmatpush1.bf16.msra.mxu0 0
      %736 = vmatprep.subr.bf16.mxu0 0
      %737 = vmatpush1.bf16.msra.mxu0 0
      %738 = vmatprep.subr.bf16.mxu0 0
      %739 = vmatpush1.bf16.msra.mxu0 0
      %740 = vmatprep.subr.bf16.mxu0 0
      %741 = vmatpush1.bf16.msra.mxu0 0
      %742 = vmatprep.subr.bf16.mxu0 0
      %743 = vmatpush1.bf16.msra.mxu0 %v726
      %744 = vmatprep.subr.bf16.mxu0 0
      %745 = vmatpush2.bf16.msra.mxu0 0
      %746 = vmatprep.subr.bf16.mxu0 0
      %747 = vmatpush2.bf16.msra.mxu0 0
      %748 = vmatprep.subr.bf16.mxu0 0
      %749 = vmatpush2.bf16.msra.mxu0 0
      %750 = vmatprep.subr.bf16.mxu0 0
      %751 = vmatpush2.bf16.msra.mxu0 0
      %752 = vmatprep.subr.bf16.mxu0 0
      %753 = vmatpush2.bf16.msra.mxu0 0
      %754 = vmatprep.subr.bf16.mxu0 0
      %755 = vmatpush2.bf16.msra.mxu0 0
      %756 = vmatprep.subr.bf16.mxu0 0
      %757 = vmatpush2.bf16.msra.mxu0 0
      %758 = vmatprep.subr.bf16.mxu0 0
      %759 = vmatpush2.bf16.msra.mxu0 0
      %760 = vmatprep.mubr.bf16.mxu0 0
      %761 = vmatmul.mubr.bf16.gmra.mxu0 %v723
      %v762 = vpop.f32.mrf.mxu0
      %v763 = vadd.f32 0.0, %v762
      %v764 = vpop.f32.mrf.mxu0
      %v765 = vpop.f32.mrf.mxu0
      %v766 = vpop.f32.mrf.mxu0
      %767 = vdwg.mxu0
      %v768 = vadd.f32 %v604, %v763
      %769 = vrot.lane.b32.xlu0 %v290, 104
      %v770 = vpop.permute.xlu0 %769
      %771 = vrot.lane.b32.xlu0 %v290, 72
      %v772 = vpop.permute.xlu0 %771
      %v774 = vsel %vm294, %v770, 0
      %v777 = vsel %vm294, %v772, 0
      %779 = vmatprep.subr.bf16.mxu0 0
      %780 = vmatpush1.bf16.xpose.msra.mxu0 0
      %781 = vmatprep.subr.bf16.mxu0 0
      %782 = vmatpush1.bf16.xpose.msra.mxu0 0
      %783 = vmatprep.subr.bf16.mxu0 0
      %784 = vmatpush1.bf16.xpose.msra.mxu0 0
      %785 = vmatprep.subr.bf16.mxu0 0
      %786 = vmatpush1.bf16.xpose.msra.mxu0 0
      %787 = vmatprep.subr.bf16.mxu0 0
      %788 = vmatpush1.bf16.xpose.msra.mxu0 0
      %789 = vmatprep.subr.bf16.mxu0 0
      %790 = vmatpush1.bf16.xpose.msra.mxu0 0
      %791 = vmatprep.subr.bf16.mxu0 0
      %792 = vmatpush1.bf16.xpose.msra.mxu0 0
      %793 = vmatprep.subr.bf16.mxu0 0
      %794 = vmatpush1.bf16.xpose.msra.mxu0 %v777
      %795 = vmatprep.subr.bf16.mxu0 0
      %796 = vmatpush2.bf16.xpose.msra.mxu0 0
      %797 = vmatprep.subr.bf16.mxu0 0
      %798 = vmatpush2.bf16.xpose.msra.mxu0 0
      %799 = vmatprep.subr.bf16.mxu0 0
      %800 = vmatpush2.bf16.xpose.msra.mxu0 0
      %801 = vmatprep.subr.bf16.mxu0 0
      %802 = vmatpush2.bf16.xpose.msra.mxu0 0
      %803 = vmatprep.subr.bf16.mxu0 0
      %804 = vmatpush2.bf16.xpose.msra.mxu0 0
      %805 = vmatprep.subr.bf16.mxu0 0
      %806 = vmatpush2.bf16.xpose.msra.mxu0 0
      %807 = vmatprep.subr.bf16.mxu0 0
      %808 = vmatpush2.bf16.xpose.msra.mxu0 0
      %809 = vmatprep.subr.bf16.mxu0 0
      %810 = vmatpush2.bf16.xpose.msra.mxu0 0
      %811 = vmatprep.mubr.bf16.mxu0 0
      %812 = vmatmul.mubr.bf16.gmra.mxu0 %v774
      %v813 = vpop.f32.mrf.mxu0
      %v814 = vadd.f32 0.0, %v813
      %v815 = vpop.f32.mrf.mxu0
      %v816 = vpop.f32.mrf.mxu0
      %v817 = vpop.f32.mrf.mxu0
      %818 = vdwg.mxu0
      %v819 = vsel %vm294, %v814, -inf
      %820 = vmax.xlane.f32.xlu0 %v819
      %v821 = vpop.xlane.xlu0 %820
      %v822 = vsub.f32 %v814, %v821
      %v823 = vmul.f32 %v822, 1.442695
      %v824 = vpow.pop %v823
      %v825 = vsel %vm294, %v824, 0.0
      %826 = vadd.xlane.f32.xlu0 %v825
      %v827 = vpop.xlane.xlu0 %826
      %v828 = vpack.c.bf16 %v824, %v824
      %829 = vrot.lane.b32.xlu0 %v290, 40
      %v830 = vpop.permute.xlu0 %829
      %v832 = vsel %vm294, %v828, 0
      %v835 = vsel %vm356, %v830, 0
      %837 = vmatprep.subr.bf16.mxu0 0
      %838 = vmatpush1.bf16.msra.mxu0 0
      %839 = vmatprep.subr.bf16.mxu0 0
      %840 = vmatpush1.bf16.msra.mxu0 0
      %841 = vmatprep.subr.bf16.mxu0 0
      %842 = vmatpush1.bf16.msra.mxu0 0
      %843 = vmatprep.subr.bf16.mxu0 0
      %844 = vmatpush1.bf16.msra.mxu0 0
      %845 = vmatprep.subr.bf16.mxu0 0
      %846 = vmatpush1.bf16.msra.mxu0 0
      %847 = vmatprep.subr.bf16.mxu0 0
      %848 = vmatpush1.bf16.msra.mxu0 0
      %849 = vmatprep.subr.bf16.mxu0 0
      %850 = vmatpush1.bf16.msra.mxu0 0
      %851 = vmatprep.subr.bf16.mxu0 0
      %852 = vmatpush1.bf16.msra.mxu0 %v835
      %853 = vmatprep.subr.bf16.mxu0 0
      %854 = vmatpush2.bf16.msra.mxu0 0
      %855 = vmatprep.subr.bf16.mxu0 0
      %856 = vmatpush2.bf16.msra.mxu0 0
      %857 = vmatprep.subr.bf16.mxu0 0
      %858 = vmatpush2.bf16.msra.mxu0 0
      %859 = vmatprep.subr.bf16.mxu0 0
      %860 = vmatpush2.bf16.msra.mxu0 0
      %861 = vmatprep.subr.bf16.mxu0 0
      %862 = vmatpush2.bf16.msra.mxu0 0
      %863 = vmatprep.subr.bf16.mxu0 0
      %864 = vmatpush2.bf16.msra.mxu0 0
      %865 = vmatprep.subr.bf16.mxu0 0
      %866 = vmatpush2.bf16.msra.mxu0 0
      %867 = vmatprep.subr.bf16.mxu0 0
      %868 = vmatpush2.bf16.msra.mxu0 0
      %869 = vmatprep.mubr.bf16.mxu0 0
      %870 = vmatmul.mubr.bf16.gmra.mxu0 %v832
      %v871 = vpop.f32.mrf.mxu0
      %v872 = vadd.f32 0.0, %v871
      %v873 = vpop.f32.mrf.mxu0
      %v874 = vpop.f32.mrf.mxu0
      %v875 = vpop.f32.mrf.mxu0
      %876 = vdwg.mxu0
      %v877 = vrcp.pop %v827
      %v878 = vmul.f32 %v872, %v877
      %v879 = vpack.c.bf16 %v878, %v878
      %s880 = scalar_lea.vmem %s3, 12
      %v881 = vld [vmem:[%s880] sm:$0xf]
      %v883 = vsel %vm294, %v879, 0
      %v886 = vsel %vm356, %v881, 0
      %888 = vmatprep.subr.bf16.mxu0 0
      %889 = vmatpush1.bf16.msra.mxu0 0
      %890 = vmatprep.subr.bf16.mxu0 0
      %891 = vmatpush1.bf16.msra.mxu0 0
      %892 = vmatprep.subr.bf16.mxu0 0
      %893 = vmatpush1.bf16.msra.mxu0 0
      %894 = vmatprep.subr.bf16.mxu0 0
      %895 = vmatpush1.bf16.msra.mxu0 0
      %896 = vmatprep.subr.bf16.mxu0 0
      %897 = vmatpush1.bf16.msra.mxu0 0
      %898 = vmatprep.subr.bf16.mxu0 0
      %899 = vmatpush1.bf16.msra.mxu0 0
      %900 = vmatprep.subr.bf16.mxu0 0
      %901 = vmatpush1.bf16.msra.mxu0 0
      %902 = vmatprep.subr.bf16.mxu0 0
      %903 = vmatpush1.bf16.msra.mxu0 %v886
      %904 = vmatprep.subr.bf16.mxu0 0
      %905 = vmatpush2.bf16.msra.mxu0 0
      %906 = vmatprep.subr.bf16.mxu0 0
      %907 = vmatpush2.bf16.msra.mxu0 0
      %908 = vmatprep.subr.bf16.mxu0 0
      %909 = vmatpush2.bf16.msra.mxu0 0
      %910 = vmatprep.subr.bf16.mxu0 0
      %911 = vmatpush2.bf16.msra.mxu0 0
      %912 = vmatprep.subr.bf16.mxu0 0
      %913 = vmatpush2.bf16.msra.mxu0 0
      %914 = vmatprep.subr.bf16.mxu0 0
      %915 = vmatpush2.bf16.msra.mxu0 0
      %916 = vmatprep.subr.bf16.mxu0 0
      %917 = vmatpush2.bf16.msra.mxu0 0
      %918 = vmatprep.subr.bf16.mxu0 0
      %919 = vmatpush2.bf16.msra.mxu0 0
      %920 = vmatprep.mubr.bf16.mxu0 0
      %921 = vmatmul.mubr.bf16.gmra.mxu0 %v883
      %v922 = vpop.f32.mrf.mxu0
      %v923 = vadd.f32 0.0, %v922
      %v924 = vpop.f32.mrf.mxu0
      %v925 = vpop.f32.mrf.mxu0
      %v926 = vpop.f32.mrf.mxu0
      %927 = vdwg.mxu0
      %v928 = vadd.f32 %v768, %v923
      %v929 = vld [vmem:[%s4] sm:$0x1]
      %v931 = vlaneseq
      %v932 = vshrl.u32 %v931, 7
      %v933 = vsub.s32 0, %v932
      %v934 = vrot.slane %v929, %v933
      %v936 = vadd.f32 %v928, %v934
      %v937 = vadd.f32 %v936, %v221
      %938 = vst.msk [vmem:[%s219] sm:$0xff] %vm246, %v937
      %p939 = scmp.lt.s32.totalorder %s16, 1
      %s940 = scalar_select %p939, %s16, 1
      %s941 = smul.addr %s940, 8
      %s942 = scalar_lea.vmem %s5, %s941
      // Predicated region
      $region41: #{attention_block.1} parent=39 // pred_check
        %p943 = pneg %p144
      $region42: #{attention_block.1} parent=39 // pred_check_branch
        %945 = sbr.rel (%p943) target = $region44
      $region43: #{attention_block.1} parent=39 // pred_region
        _
      $region44: #{attention_block.1} parent=39 // pred_fallthru
        _
    $region40: #{attention_block.1} parent=5 // pred_fallthru
      _
    %p946 = scmp.le.s32.totalorder 2, %s11
    // Predicated region
    $region45: #{attention_block.1} parent=5 // pred_check
      %p947 = pneg %p946
    $region46: #{attention_block.1} parent=5 // pred_check_branch
      %949 = sbr.rel (%p947) target = $region48
    $region47: #{attention_block.1} parent=5 // pred_region
      %s950 = ssub.s32 %s11, 2
      // Predicated region
      $region49: #{attention_block.1} parent=47 // pred_check
        %p951 = pneg %p150
      $region50: #{attention_block.1} parent=47 // pred_check_branch
        %953 = sbr.rel (%p951) target = $region52
      $region51: #{attention_block.1} parent=47 // pred_region
        %p954 = scmp.lt.s32.totalorder %s17, 1
        %s955 = scalar_select %p954, %s17, 1
        %s956 = smul.addr %s955, 8
        %s957 = scalar_lea.vmem %s5, %s956
      $region52: #{attention_block.1} parent=47 // pred_fallthru
        _
    $region48: #{attention_block.1} parent=5 // pred_fallthru
      _
  $region6: #{attention_block.1} parent=0 // loop_footer
    %s15 = sadd.s32 1, %s11
  $region7: #{attention_block.1} parent=0 // loop_footer_branch
    %10 = sbr.rel target = $region3
  $region8: #{attention_block.1} parent=0 // loop_exit
    _

</llo_original>
